<compile_context>
chip_gen: v7x
topology: tpu7x:2x2x1
jax: 0.10.0
libtpu: 0.0.40
codegen_flags: <defaults>
</compile_context>

<pallas_src>
import functools

import numpy as np
import jax
import jax.numpy as jnp
from jax.experimental import pallas as pl
from jax.experimental.pallas import tpu as pltpu

UNK_IDX = 3
TILE_B = 8      # sublane tile for the batch axis
LANE = 128      # lane width; sequence axis padded to a multiple of this


def _lookup_kernel(codes_ref, out_ref):
    """Per-character vocab lookup as pure-VPU compares/selects.

    vocab layout:  0:'<' 1:'>' 2:'@' 3:'#'(unk) 4:' ' 5:',' 6:'.' 7:'?' 8:'-'
                   9..34: 'a'..'z'  (idx = ord(c) - 97 + 9 = ord(c) - 88)
    anything else -> unk (3).  ('#' itself falls through to unk = 3, which is correct.)
    """
    c = codes_ref[...]                                  # (TILE_B, L_pad) int32
    is_alpha = (c >= 97) & (c <= 122)
    idx = jnp.where(is_alpha, c - 88, UNK_IDX)
    idx = jnp.where(c == 60, 0, idx)    # '<'
    idx = jnp.where(c == 62, 1, idx)    # '>'
    idx = jnp.where(c == 64, 2, idx)    # '@'
    idx = jnp.where(c == 32, 4, idx)    # ' '
    idx = jnp.where(c == 44, 5, idx)    # ','
    idx = jnp.where(c == 46, 6, idx)    # '.'
    idx = jnp.where(c == 63, 7, idx)    # '?'
    idx = jnp.where(c == 45, 8, idx)    # '-'
    out_ref[...] = idx


@functools.lru_cache(maxsize=None)
def _make_lookup(b_pad: int, l_pad: int):
    """Build (once per shape) the jitted pallas_call for a (b_pad, l_pad) codes block."""
    assert b_pad % TILE_B == 0 and l_pad % LANE == 0
    call = pl.pallas_call(
        _lookup_kernel,
        out_shape=jax.ShapeDtypeStruct((b_pad, l_pad), jnp.int32),
        grid=(b_pad // TILE_B,),
        in_specs=[pl.BlockSpec((TILE_B, l_pad), lambda i: (i, 0))],
        out_specs=pl.BlockSpec((TILE_B, l_pad), lambda i: (i, 0)),
        compiler_params=pltpu.CompilerParams(dimension_semantics=("parallel",)),
    )
    return jax.jit(call)


class TokenVectorizerPallas:
    """JAX/Pallas re-implementation of TokenVectorizer.forward (int32 output)."""

    def __init__(self, n_vocab: int, max_len: int = 50,
                 start: str = '<', stop: str = '>', empty: str = '@', unk: str = '#'):
        self._max_len = max_len
        self._start, self._stop, self._empty, self._unk = start, stop, empty, unk
        vocab = [' ', ',', '.', '?', '-'] + [chr(i + 96) for i in range(1, 27)]
        assert start not in vocab and stop not in vocab
        assert empty not in vocab and unk not in vocab
        self._vocab = [start, stop, empty, unk] + vocab
        assert len(self._vocab) == n_vocab
        self._unk_idx = UNK_IDX
        self._mapper = {c: i for i, c in enumerate(self._vocab)}
        self._inv_mapper = {v: k for k, v in self._mapper.items()}
        # lane-align the sequence axis
        self._l_pad = ((max_len + LANE - 1) // LANE) * LANE

    # --- properties mirroring the PyTorch module ---
    @property
    def mapper(self):
        return self._mapper

    @property
    def invert_mapper(self):
        return self._inv_mapper

    @property
    def vocab(self):
        return self._vocab

    # --- host-side string glue (mirrors the PyTorch forward exactly) ---
    def _encode_row(self, transcript: str) -> np.ndarray:
        t = transcript.lower()[: self._max_len - 2]
        t = self._start + t + self._stop
        try:
            row = np.frombuffer(t.encode('ascii'), dtype=np.uint8).astype(np.int32)
        except UnicodeEncodeError:
            # Non-ASCII chars: keep codepoints; anything not in vocab -> unk in-kernel.
            row = np.fromiter(map(ord, t), dtype=np.int32, count=len(t))
        return row

    def forward_batch(self, transcripts) -> jax.Array:
        """Vectorize a list of transcripts -> (B, max_len) int32."""
        b = len(transcripts)
        b_pad = ((b + TILE_B - 1) // TILE_B) * TILE_B
        # Pre-fill with the empty char code: padding (both seq and batch) is free.
        codes = np.full((b_pad, self._l_pad), ord(self._empty), dtype=np.int32)
        for r, tr in enumerate(transcripts):
            row = self._encode_row(tr)
            codes[r, : row.shape[0]] = row
        lookup = _make_lookup(b_pad, self._l_pad)
        out = lookup(jnp.asarray(codes))
        return out[:b, : self._max_len]

    def forward(self, transcript: str) -> jax.Array:
        return self.forward_batch([transcript])[0]

    def __call__(self, transcript: str) -> jax.Array:
        return self.forward(transcript)

    # Pure-python reference (torch-free) for verification.
    def reference(self, transcript: str) -> np.ndarray:
        t = transcript.lower()[: self._max_len - 2]
        t = self._start + t + self._stop
        pad = [self._mapper[self._empty]] * (self._max_len - len(t))
        return np.array([self._mapper.get(c, self._unk_idx) for c in t] + pad,
                        dtype=np.int32)


if __name__ == "__main__":
    n_vocab, max_len = 35, 50  # n_vocab fixed by the module's vocab; default max_len
    vec = TokenVectorizerPallas(n_vocab=n_vocab, max_len=max_len)

    # Deterministic example inputs: random vocab characters seeded with PRNGKey(0),
    # plus edge cases (out-of-vocab char, uppercase, over-length transcript).
    key = jax.random.PRNGKey(0)
    keys = jax.random.split(key, 4)
    lengths = [10, 30, 70, 0]  # 70 > max_len exercises truncation; 0 exercises padding
    transcripts = []
    for k, L in zip(keys, lengths):
        idxs = np.asarray(jax.random.randint(k, (max(L, 1),), 4, n_vocab))[:L]
        transcripts.append("".join(vec.invert_mapper[int(i)] for i in idxs))
    transcripts[0] = transcripts[0] + "!"        # out-of-vocab -> unk
    transcripts[1] = transcripts[1].upper()      # exercises .lower()

    out = vec.forward_batch(transcripts)
    out = jax.block_until_ready(out)

    expected = np.stack([vec.reference(t) for t in transcripts])
    assert out.shape == (len(transcripts), max_len), out.shape
    np.testing.assert_array_equal(np.asarray(out), expected)

    # Single-transcript API still works.
    single = jax.block_until_ready(vec(transcripts[0]))
    np.testing.assert_array_equal(np.asarray(single), expected[0])

    print("KERNEL_OK")
</pallas_src>

<mosaic_0001>
module attributes {stable_mosaic.version = 11 : i64} {
  func.func @_lookup_kernel(%arg0: i32, %arg1: memref<8x128xi32, #tpu.memory_space<vmem>>, %arg2: memref<8x128xi32, #tpu.memory_space<vmem>>) attributes {dimension_semantics = [#tpu.dimension_semantics<parallel>], iteration_bounds = array<i64: 1>, scalar_prefetch = 0 : i64, scratch_operands = 0 : i64, tpu.core_type = #tpu.core_type<tc>, window_params = [{transform_indices = @transform_0, window_bounds = array<i64: 8, 128>}, {transform_indices = @transform_1, window_bounds = array<i64: 8, 128>}]} {
    %c0 = arith.constant 0 : index
    %c0_0 = arith.constant 0 : index
    %0 = vector.load %arg1[%c0, %c0_0] : memref<8x128xi32, #tpu.memory_space<vmem>>, vector<8x128xi32>
    %c97_i32 = arith.constant 97 : i32
    %1 = vector.broadcast %c97_i32 : i32 to vector<8x128xi32>
    %2 = arith.cmpi sge, %0, %1 : vector<8x128xi32>
    %c122_i32 = arith.constant 122 : i32
    %3 = vector.broadcast %c122_i32 : i32 to vector<8x128xi32>
    %4 = arith.cmpi sle, %0, %3 : vector<8x128xi32>
    %5 = arith.andi %2, %4 : vector<8x128xi1>
    %c88_i32 = arith.constant 88 : i32
    %6 = vector.broadcast %c88_i32 : i32 to vector<8x128xi32>
    %7 = arith.subi %0, %6 : vector<8x128xi32>
    %c3_i32 = arith.constant 3 : i32
    %8 = vector.broadcast %c3_i32 : i32 to vector<8x128xi32>
    %9 = arith.select %5, %7, %8 : vector<8x128xi1>, vector<8x128xi32>
    %c60_i32 = arith.constant 60 : i32
    %10 = vector.broadcast %c60_i32 : i32 to vector<8x128xi32>
    %11 = arith.cmpi eq, %0, %10 : vector<8x128xi32>
    %c0_i32 = arith.constant 0 : i32
    %12 = vector.broadcast %c0_i32 : i32 to vector<8x128xi32>
    %13 = arith.select %11, %12, %9 : vector<8x128xi1>, vector<8x128xi32>
    %c62_i32 = arith.constant 62 : i32
    %14 = vector.broadcast %c62_i32 : i32 to vector<8x128xi32>
    %15 = arith.cmpi eq, %0, %14 : vector<8x128xi32>
    %c1_i32 = arith.constant 1 : i32
    %16 = vector.broadcast %c1_i32 : i32 to vector<8x128xi32>
    %17 = arith.select %15, %16, %13 : vector<8x128xi1>, vector<8x128xi32>
    %c64_i32 = arith.constant 64 : i32
    %18 = vector.broadcast %c64_i32 : i32 to vector<8x128xi32>
    %19 = arith.cmpi eq, %0, %18 : vector<8x128xi32>
    %c2_i32 = arith.constant 2 : i32
    %20 = vector.broadcast %c2_i32 : i32 to vector<8x128xi32>
    %21 = arith.select %19, %20, %17 : vector<8x128xi1>, vector<8x128xi32>
    %c32_i32 = arith.constant 32 : i32
    %22 = vector.broadcast %c32_i32 : i32 to vector<8x128xi32>
    %23 = arith.cmpi eq, %0, %22 : vector<8x128xi32>
    %c4_i32 = arith.constant 4 : i32
    %24 = vector.broadcast %c4_i32 : i32 to vector<8x128xi32>
    %25 = arith.select %23, %24, %21 : vector<8x128xi1>, vector<8x128xi32>
    %c44_i32 = arith.constant 44 : i32
    %26 = vector.broadcast %c44_i32 : i32 to vector<8x128xi32>
    %27 = arith.cmpi eq, %0, %26 : vector<8x128xi32>
    %c5_i32 = arith.constant 5 : i32
    %28 = vector.broadcast %c5_i32 : i32 to vector<8x128xi32>
    %29 = arith.select %27, %28, %25 : vector<8x128xi1>, vector<8x128xi32>
    %c46_i32 = arith.constant 46 : i32
    %30 = vector.broadcast %c46_i32 : i32 to vector<8x128xi32>
    %31 = arith.cmpi eq, %0, %30 : vector<8x128xi32>
    %c6_i32 = arith.constant 6 : i32
    %32 = vector.broadcast %c6_i32 : i32 to vector<8x128xi32>
    %33 = arith.select %31, %32, %29 : vector<8x128xi1>, vector<8x128xi32>
    %c63_i32 = arith.constant 63 : i32
    %34 = vector.broadcast %c63_i32 : i32 to vector<8x128xi32>
    %35 = arith.cmpi eq, %0, %34 : vector<8x128xi32>
    %c7_i32 = arith.constant 7 : i32
    %36 = vector.broadcast %c7_i32 : i32 to vector<8x128xi32>
    %37 = arith.select %35, %36, %33 : vector<8x128xi1>, vector<8x128xi32>
    %c45_i32 = arith.constant 45 : i32
    %38 = vector.broadcast %c45_i32 : i32 to vector<8x128xi32>
    %39 = arith.cmpi eq, %0, %38 : vector<8x128xi32>
    %c8_i32 = arith.constant 8 : i32
    %40 = vector.broadcast %c8_i32 : i32 to vector<8x128xi32>
    %41 = arith.select %39, %40, %37 : vector<8x128xi1>, vector<8x128xi32>
    %c0_1 = arith.constant 0 : index
    %c0_2 = arith.constant 0 : index
    %42 = vector.load %arg2[%c0_1, %c0_2] : memref<8x128xi32, #tpu.memory_space<vmem>>, vector<8x128xi32>
    tpu.vector_store %arg2[%c0_1, %c0_2], %41 {strides = array<i32>} : memref<8x128xi32, #tpu.memory_space<vmem>>, vector<8x128xi32>,
    return
  }
  func.func @transform_0(%arg0: i32) -> (i32, i32) {
    %c0_i32 = arith.constant 0 : i32
    %c0_i32_0 = arith.constant 0 : i32
    return %arg0, %c0_i32 : i32, i32
  }
  func.func @transform_1(%arg0: i32) -> (i32, i32) {
    %c0_i32 = arith.constant 0 : i32
    %c0_i32_0 = arith.constant 0 : i32
    return %arg0, %c0_i32 : i32, i32
  }
}

</mosaic_0001>

<llo_original>
// kernel: tpu_custom_call.1
$region0: #{tpu_custom_call.1}
  #allocation0 [shape = 'u32[]', space=smem, size = 0x4, offset = 0x4, fixed_abs, tag = 'smem constant byte address 0x4 - core index']
  #allocation1 [shape = 'u32[144,128]{1,0:T(1,128)}', space=vmem, size = 0x12000, scoped, tag = 'internal scratch']
  %s0 = inlined_call_operand.hbm [shape: s32[8,128], index: 0, kind: input, shape index: {}]
  %s1 = inlined_call_operand.hbm [shape: s32[8,128], index: 1, kind: output, shape index: {}]
  %s2 = sld [smem:[#allocation0]]
  $region18: #{tpu_custom_call.1} parent=0
    _
  %s4 = ssub.s32 1, %s2
  %s5 = scalar_select 0, %s4, %s2
  $region1: #{tpu_custom_call.1} parent=0
    #allocation2 [shape = 'u8[4096]{0}', space=vmem, size = 0x1000, scoped, tag = 'input window, operand 0, single buffered']
    #allocation3 [shape = 's32[1]{0}', space=sflag, size = 0x4, scoped, tag = 'scoped memory for tpu_custom_call.1']
    #allocation4 [shape = 's32[1]{0}', space=sflag, size = 0x4, scoped, tag = 'scoped memory for tpu_custom_call.1']
    #allocation5 [shape = 'u8[4096]{0}', space=vmem, size = 0x1000, scoped, tag = 'output window, operand 0, single buffered']
    %6 = vsyncpa [#allocation3], 0
    %7 = vsyncpa [#allocation4], 0
    // Predicated region
    $region2: #{tpu_custom_call.1} parent=1 // pred_check
      _
    $region3: #{tpu_custom_call.1} parent=1 // pred_check_branch
      %9 = sbr.rel (0) target = $region5
    $region4: #{tpu_custom_call.1} parent=1 // pred_region
      %s11 = ssub.s32 128, 128
      %12 = vsyncadd [#allocation3], %s11
      %s14 = sshll.u32 [#allocation2], 4
      %s15 = int_to_ptr.vmem [resolvable:$true] %s14
      %17 = dma.hbm_to_vmem [thread:$0]  %s0, 128, %s15, [#allocation3]
    $region5: #{tpu_custom_call.1} parent=1 // pred_fallthru
      _
    // Predicated region
    $region6: #{tpu_custom_call.1} parent=1 // pred_check
      _
    $region7: #{tpu_custom_call.1} parent=1 // pred_check_branch
      %19 = sbr.rel (0) target = $region9
    $region8: #{tpu_custom_call.1} parent=1 // pred_region
      %20 = dma.done [#allocation3], 128
    $region9: #{tpu_custom_call.1} parent=1 // pred_fallthru
      _
    %v21 = vld [vmem:[#allocation2] sm:$0xff]
    %vm22 = vcmp.ge.s32.totalorder %v21, 97
    %vm23 = vcmp.le.s32.totalorder %v21, 122
    %vm24 = vmand %vm22, %vm23
    %v25 = vsub.s32 %v21, 88
    %v26 = vsel %vm24, %v25, 3
    %vm27 = vcmp.eq.s32.totalorder %v21, 60
    %v28 = vsel %vm27, 0, %v26
    %vm29 = vcmp.eq.s32.totalorder %v21, 62
    %v30 = vsel %vm29, 1, %v28
    %vm31 = vcmp.eq.s32.totalorder %v21, 64
    %v32 = vsel %vm31, 2, %v30
    %vm33 = vcmp.eq.s32.totalorder %v21, 32
    %v34 = vsel %vm33, 4, %v32
    %vm35 = vcmp.eq.s32.totalorder %v21, 44
    %v36 = vsel %vm35, 5, %v34
    %vm37 = vcmp.eq.s32.totalorder %v21, 46
    %v38 = vsel %vm37, 6, %v36
    %vm39 = vcmp.eq.s32.totalorder %v21, 63
    %v40 = vsel %vm39, 7, %v38
    %vm41 = vcmp.eq.s32.totalorder %v21, 45
    %v42 = vsel %vm41, 8, %v40
    %43 = vst [vmem:[#allocation5] sm:$0xff] %v42
    // Predicated region
    $region10: #{tpu_custom_call.1} parent=1 // pred_check
      _
    $region11: #{tpu_custom_call.1} parent=1 // pred_check_branch
      %45 = sbr.rel (0) target = $region13
    $region12: #{tpu_custom_call.1} parent=1 // pred_region
      %s47 = ssub.s32 128, 128
      %48 = vsyncadd [#allocation4], %s47
      %s50 = sshll.u32 [#allocation5], 4
      %s51 = int_to_ptr.vmem [resolvable:$true] %s50
      %53 = dma.vmem_to_hbm [thread:$0]  %s51, 128, %s1, [#allocation4]
    $region13: #{tpu_custom_call.1} parent=1 // pred_fallthru
      _
    // Predicated region
    $region14: #{tpu_custom_call.1} parent=1 // pred_check
      _
    $region15: #{tpu_custom_call.1} parent=1 // pred_check_branch
      %55 = sbr.rel (0) target = $region17
    $region16: #{tpu_custom_call.1} parent=1 // pred_region
      %56 = dma.done [#allocation4], 128
    $region17: #{tpu_custom_call.1} parent=1 // pred_fallthru
      _
    %57 = vsyncpa [#allocation3], 1
    %58 = vsyncpa [#allocation4], 1

</llo_original>
